<compile_context>
chip_gen: v7x
topology: tpu7x:2x2x1
jax: 0.10.0
libtpu: 0.0.40
codegen_flags: <defaults>
</compile_context>

<pallas_src>
import jax
import jax.numpy as jnp
from jax.experimental import pallas as pl
from jax.experimental.pallas import tpu as pltpu


def _actor_kernel(x_ref,
                  w1_ref, b1_ref,
                  w2_ref, b2_ref,
                  w3_ref, b3_ref,
                  w4_ref, b4_ref,
                  out_ref):
    """One batch tile: 4 MXU matmuls + f32 bias/ReLU + numerically-stable softmax."""
    h = x_ref[...]

    def linear(h, w_ref, b_ref):
        # Cast activations to the weight dtype at the MXU boundary only
        # (bf16 inputs on v6e/v7x); accumulate in f32; bias add stays f32.
        acc = jnp.dot(h.astype(w_ref.dtype), w_ref[...],
                      preferred_element_type=jnp.float32)
        return acc + b_ref[...]          # b_ref is (1, out) -> broadcasts over rows

    h = jnp.maximum(linear(h, w1_ref, b1_ref), 0.0)
    h = jnp.maximum(linear(h, w2_ref, b2_ref), 0.0)
    h = jnp.maximum(linear(h, w3_ref, b3_ref), 0.0)
    logits = linear(h, w4_ref, b4_ref)

    # Softmax over the last dim (matches F.softmax(..., dim=-1)), all in f32.
    # Exact divide (not approx reciprocal): out_dim is tiny, and this keeps
    # rows summing to 1.0 to f32 precision on every backend.
    m = jnp.max(logits, axis=-1, keepdims=True)
    e = jnp.exp(logits - m)
    denom = jnp.sum(e, axis=-1, keepdims=True)
    out_ref[...] = (e / denom).astype(out_ref.dtype)


def actor_forward(x, params, *, block_batch=256, compute_dtype=None):
    """x: (B, input_dim) float32.

    params: dict with w1..w4 stored (in_dim, out_dim) and b1..b4 stored (1, out_dim).
    compute_dtype: dtype for the MXU inputs (weights + activations).  None -> f32
        (exact parity with the f32 PyTorch module); jnp.bfloat16 recommended on
        v6e/v7x for 2x MXU throughput and half the weight/input DMA bytes.
    """
    B, input_dim = x.shape
    hidden_dim = params["w1"].shape[1]
    out_dim = params["w4"].shape[1]

    if compute_dtype is None:
        compute_dtype = jnp.float32

    x_in = x.astype(compute_dtype)
    ws = [params[f"w{i}"].astype(compute_dtype) for i in range(1, 5)]
    bs = [params[f"b{i}"].astype(jnp.float32) for i in range(1, 5)]

    # Batch tile: multiple of 8 (f32 sublane) when B >= block_batch; for
    # B < block_batch the block equals the full batch dim (always legal).
    tb = min(block_batch, B)
    grid = (pl.cdiv(B, tb),)

    def tile_spec(dim):
        return pl.BlockSpec((tb, dim), lambda i: (i, 0))

    def resident_spec(shape):
        # Same block every grid step -> parameter stays resident in VMEM.
        return pl.BlockSpec(shape, lambda i: (0, 0))

    args = [x_in]
    in_specs = [tile_spec(input_dim)]
    for w, b in zip(ws, bs):
        args.extend((w, b))
        in_specs.extend((resident_spec(w.shape), resident_spec(b.shape)))

    flops = 2 * B * (input_dim * hidden_dim
                     + 2 * hidden_dim * hidden_dim
                     + hidden_dim * out_dim)
    transcendentals = B * out_dim                 # exp per logit
    bytes_accessed = (sum(a.size * a.dtype.itemsize for a in args)
                      + B * out_dim * 4)

    return pl.pallas_call(
        _actor_kernel,
        out_shape=jax.ShapeDtypeStruct((B, out_dim), jnp.float32),
        grid=grid,
        in_specs=in_specs,
        out_specs=pl.BlockSpec((tb, out_dim), lambda i: (i, 0)),
        compiler_params=pltpu.CompilerParams(
            dimension_semantics=("parallel",)),      # megacore sharding on v7x
        cost_estimate=pl.CostEstimate(
            flops=flops,
            transcendentals=transcendentals,
            bytes_accessed=bytes_accessed),
    )(*args)


def init_actor_params(key, input_dim, hidden_dim, output_dim):
    """Deterministic init mimicking PyTorch nn.Linear default U[-1/sqrt(fan_in), 1/sqrt(fan_in)]."""
    dims = [(input_dim, hidden_dim),
            (hidden_dim, hidden_dim),
            (hidden_dim, hidden_dim),
            (hidden_dim, output_dim)]
    params = {}
    keys = jax.random.split(key, 2 * len(dims))
    for idx, (fan_in, fan_out) in enumerate(dims):
        bound = 1.0 / jnp.sqrt(jnp.float32(fan_in))
        # weight stored pre-transposed: (in_dim, out_dim) so the kernel does x @ W + b
        params[f"w{idx + 1}"] = jax.random.uniform(
            keys[2 * idx], (fan_in, fan_out), jnp.float32, -bound, bound)
        params[f"b{idx + 1}"] = jax.random.uniform(
            keys[2 * idx + 1], (1, fan_out), jnp.float32, -bound, bound)
    return params


def actor_reference(x, params):
    """Pure-JAX reference of the same forward pass (for sanity checking)."""
    h = x
    for i in range(1, 4):
        h = jnp.maximum(h @ params[f"w{i}"] + params[f"b{i}"], 0.0)
    logits = h @ params["w4"] + params["b4"]
    return jax.nn.softmax(logits, axis=-1)


if __name__ == "__main__":
    key = jax.random.PRNGKey(0)
    k_param, k_x, k_x2 = jax.random.split(key, 3)

    batch, input_dim, hidden_dim, output_dim = 8, 16, 32, 8
    params = init_actor_params(k_param, input_dim, hidden_dim, output_dim)

    # Small-batch f32 run (exact precision path of the original PyTorch module).
    x = jax.random.normal(k_x, (batch, input_dim), jnp.float32)
    out = jax.block_until_ready(actor_forward(x, params))
    ref = actor_reference(x, params)
    assert out.shape == (batch, output_dim)
    assert jnp.allclose(jnp.sum(out, axis=-1), 1.0, atol=1e-4)
    assert jnp.allclose(out, ref, atol=1e-4, rtol=1e-4)

    # Larger batch: exercises the tiled, pipelined, "parallel" batch grid
    # (2 tiles of 256 rows) and the bf16-MXU path recommended for v6e/v7x.
    big_batch = 512
    xb = jax.random.normal(k_x2, (big_batch, input_dim), jnp.float32)
    out_bf16 = jax.block_until_ready(
        actor_forward(xb, params, block_batch=256, compute_dtype=jnp.bfloat16))
    ref_b = actor_reference(xb, params)
    assert out_bf16.shape == (big_batch, output_dim)
    assert jnp.allclose(jnp.sum(out_bf16, axis=-1), 1.0, atol=1e-3)
    assert jnp.allclose(out_bf16, ref_b, atol=5e-2, rtol=5e-2)

    print("KERNEL_OK")
</pallas_src>

<mosaic_0001>
module attributes {stable_mosaic.version = 11 : i64} {
  func.func @_actor_kernel(%arg0: i32, %arg1: memref<8x16xf32, #tpu.memory_space<vmem>>, %arg2: memref<16x32xf32, #tpu.memory_space<vmem>>, %arg3: memref<1x32xf32, #tpu.memory_space<vmem>>, %arg4: memref<32x32xf32, #tpu.memory_space<vmem>>, %arg5: memref<1x32xf32, #tpu.memory_space<vmem>>, %arg6: memref<32x32xf32, #tpu.memory_space<vmem>>, %arg7: memref<1x32xf32, #tpu.memory_space<vmem>>, %arg8: memref<32x8xf32, #tpu.memory_space<vmem>>, %arg9: memref<1x8xf32, #tpu.memory_space<vmem>>, %arg10: memref<8x8xf32, #tpu.memory_space<vmem>>) attributes {dimension_semantics = [#tpu.dimension_semantics<parallel>], iteration_bounds = array<i64: 1>, scalar_prefetch = 0 : i64, scratch_operands = 0 : i64, tpu.core_type = #tpu.core_type<tc>, window_params = [{transform_indices = @transform_0, window_bounds = array<i64: 8, 16>}, {pipeline_mode = #tpu.pipeline_mode<synchronous>, transform_indices = @transform_1, window_bounds = array<i64: 16, 32>}, {pipeline_mode = #tpu.pipeline_mode<synchronous>, transform_indices = @transform_2, window_bounds = array<i64: 1, 32>}, {pipeline_mode = #tpu.pipeline_mode<synchronous>, transform_indices = @transform_3, window_bounds = array<i64: 32, 32>}, {pipeline_mode = #tpu.pipeline_mode<synchronous>, transform_indices = @transform_4, window_bounds = array<i64: 1, 32>}, {pipeline_mode = #tpu.pipeline_mode<synchronous>, transform_indices = @transform_5, window_bounds = array<i64: 32, 32>}, {pipeline_mode = #tpu.pipeline_mode<synchronous>, transform_indices = @transform_6, window_bounds = array<i64: 1, 32>}, {pipeline_mode = #tpu.pipeline_mode<synchronous>, transform_indices = @transform_7, window_bounds = array<i64: 32, 8>}, {pipeline_mode = #tpu.pipeline_mode<synchronous>, transform_indices = @transform_8, window_bounds = array<i64: 1, 8>}, {transform_indices = @transform_9, window_bounds = array<i64: 8, 8>}]} {
    %c0 = arith.constant 0 : index
    %c0_0 = arith.constant 0 : index
    %0 = vector.load %arg1[%c0, %c0_0] : memref<8x16xf32, #tpu.memory_space<vmem>>, vector<8x16xf32>
    %c0_1 = arith.constant 0 : index
    %c0_2 = arith.constant 0 : index
    %1 = vector.load %arg2[%c0_1, %c0_2] : memref<16x32xf32, #tpu.memory_space<vmem>>, vector<16x32xf32>
    %cst = arith.constant dense<0.000000e+00> : vector<8x32xf32>
    %2 = tpu.matmul %0, %1, %cst {dimension_numbers = #tpu.dot_dimension_numbers<[1], [0], [0], [1], [0, 0, 1, 1], [], []>} : vector<8x16xf32>, vector<16x32xf32>, vector<8x32xf32> -> vector<8x32xf32>
    %c0_3 = arith.constant 0 : index
    %c0_4 = arith.constant 0 : index
    %3 = vector.load %arg3[%c0_3, %c0_4] : memref<1x32xf32, #tpu.memory_space<vmem>>, vector<1x32xf32>
    %4 = vector.broadcast %3 : vector<1x32xf32> to vector<8x32xf32>
    %5 = arith.addf %2, %4 : vector<8x32xf32>
    %cst_5 = arith.constant 0.000000e+00 : f32
    %6 = vector.broadcast %cst_5 : f32 to vector<8x32xf32>
    %7 = arith.maximumf %5, %6 : vector<8x32xf32>
    %c0_6 = arith.constant 0 : index
    %c0_7 = arith.constant 0 : index
    %8 = vector.load %arg4[%c0_6, %c0_7] : memref<32x32xf32, #tpu.memory_space<vmem>>, vector<32x32xf32>
    %cst_8 = arith.constant dense<0.000000e+00> : vector<8x32xf32>
    %9 = tpu.matmul %7, %8, %cst_8 {dimension_numbers = #tpu.dot_dimension_numbers<[1], [0], [0], [1], [0, 0, 1, 1], [], []>} : vector<8x32xf32>, vector<32x32xf32>, vector<8x32xf32> -> vector<8x32xf32>
    %c0_9 = arith.constant 0 : index
    %c0_10 = arith.constant 0 : index
    %10 = vector.load %arg5[%c0_9, %c0_10] : memref<1x32xf32, #tpu.memory_space<vmem>>, vector<1x32xf32>
    %11 = vector.broadcast %10 : vector<1x32xf32> to vector<8x32xf32>
    %12 = arith.addf %9, %11 : vector<8x32xf32>
    %cst_11 = arith.constant 0.000000e+00 : f32
    %13 = vector.broadcast %cst_11 : f32 to vector<8x32xf32>
    %14 = arith.maximumf %12, %13 : vector<8x32xf32>
    %c0_12 = arith.constant 0 : index
    %c0_13 = arith.constant 0 : index
    %15 = vector.load %arg6[%c0_12, %c0_13] : memref<32x32xf32, #tpu.memory_space<vmem>>, vector<32x32xf32>
    %cst_14 = arith.constant dense<0.000000e+00> : vector<8x32xf32>
    %16 = tpu.matmul %14, %15, %cst_14 {dimension_numbers = #tpu.dot_dimension_numbers<[1], [0], [0], [1], [0, 0, 1, 1], [], []>} : vector<8x32xf32>, vector<32x32xf32>, vector<8x32xf32> -> vector<8x32xf32>
    %c0_15 = arith.constant 0 : index
    %c0_16 = arith.constant 0 : index
    %17 = vector.load %arg7[%c0_15, %c0_16] : memref<1x32xf32, #tpu.memory_space<vmem>>, vector<1x32xf32>
    %18 = vector.broadcast %17 : vector<1x32xf32> to vector<8x32xf32>
    %19 = arith.addf %16, %18 : vector<8x32xf32>
    %cst_17 = arith.constant 0.000000e+00 : f32
    %20 = vector.broadcast %cst_17 : f32 to vector<8x32xf32>
    %21 = arith.maximumf %19, %20 : vector<8x32xf32>
    %c0_18 = arith.constant 0 : index
    %c0_19 = arith.constant 0 : index
    %22 = vector.load %arg8[%c0_18, %c0_19] : memref<32x8xf32, #tpu.memory_space<vmem>>, vector<32x8xf32>
    %cst_20 = arith.constant dense<0.000000e+00> : vector<8x8xf32>
    %23 = tpu.matmul %21, %22, %cst_20 {dimension_numbers = #tpu.dot_dimension_numbers<[1], [0], [0], [1], [0, 0, 1, 1], [], []>} : vector<8x32xf32>, vector<32x8xf32>, vector<8x8xf32> -> vector<8x8xf32>
    %c0_21 = arith.constant 0 : index
    %c0_22 = arith.constant 0 : index
    %24 = vector.load %arg9[%c0_21, %c0_22] : memref<1x8xf32, #tpu.memory_space<vmem>>, vector<1x8xf32>
    %25 = vector.broadcast %24 : vector<1x8xf32> to vector<8x8xf32>
    %26 = arith.addf %23, %25 : vector<8x8xf32>
    %cst_23 = arith.constant dense<0xFF800000> : vector<8xf32>
    %27 = vector.multi_reduction <maximumf>, %26, %cst_23 [1] : vector<8x8xf32> to vector<8xf32>
    %28 = vector.shape_cast %27 : vector<8xf32> to vector<8x1xf32>
    %29 = vector.broadcast %28 : vector<8x1xf32> to vector<8x8xf32>
    %30 = arith.subf %26, %29 : vector<8x8xf32>
    %31 = math.exp %30 : vector<8x8xf32>
    %cst_24 = arith.constant dense<0.000000e+00> : vector<8xf32>
    %32 = vector.multi_reduction <add>, %31, %cst_24 [1] : vector<8x8xf32> to vector<8xf32>
    %33 = vector.shape_cast %32 : vector<8xf32> to vector<8x1xf32>
    %34 = vector.broadcast %33 : vector<8x1xf32> to vector<8x8xf32>
    %35 = arith.divf %31, %34 : vector<8x8xf32>
    %c0_25 = arith.constant 0 : index
    %c0_26 = arith.constant 0 : index
    %36 = vector.load %arg10[%c0_25, %c0_26] : memref<8x8xf32, #tpu.memory_space<vmem>>, vector<8x8xf32>
    tpu.vector_store %arg10[%c0_25, %c0_26], %35 {strides = array<i32>} : memref<8x8xf32, #tpu.memory_space<vmem>>, vector<8x8xf32>,
    return
  }
  func.func @transform_0(%arg0: i32) -> (i32, i32) {
    %c0_i32 = arith.constant 0 : i32
    %c0_i32_0 = arith.constant 0 : i32
    return %arg0, %c0_i32 : i32, i32
  }
  func.func @transform_1(%arg0: i32) -> (i32, i32) {
    %c0_i32 = arith.constant 0 : i32
    %c0_i32_0 = arith.constant 0 : i32
    %c0_i32_1 = arith.constant 0 : i32
    return %c0_i32, %c0_i32_0 : i32, i32
  }
  func.func @transform_2(%arg0: i32) -> (i32, i32) {
    %c0_i32 = arith.constant 0 : i32
    %c0_i32_0 = arith.constant 0 : i32
    %c0_i32_1 = arith.constant 0 : i32
    return %c0_i32, %c0_i32_0 : i32, i32
  }
  func.func @transform_3(%arg0: i32) -> (i32, i32) {
    %c0_i32 = arith.constant 0 : i32
    %c0_i32_0 = arith.constant 0 : i32
    %c0_i32_1 = arith.constant 0 : i32
    return %c0_i32, %c0_i32_0 : i32, i32
  }
  func.func @transform_4(%arg0: i32) -> (i32, i32) {
    %c0_i32 = arith.constant 0 : i32
    %c0_i32_0 = arith.constant 0 : i32
    %c0_i32_1 = arith.constant 0 : i32
    return %c0_i32, %c0_i32_0 : i32, i32
  }
  func.func @transform_5(%arg0: i32) -> (i32, i32) {
    %c0_i32 = arith.constant 0 : i32
    %c0_i32_0 = arith.constant 0 : i32
    %c0_i32_1 = arith.constant 0 : i32
    return %c0_i32, %c0_i32_0 : i32, i32
  }
  func.func @transform_6(%arg0: i32) -> (i32, i32) {
    %c0_i32 = arith.constant 0 : i32
    %c0_i32_0 = arith.constant 0 : i32
    %c0_i32_1 = arith.constant 0 : i32
    return %c0_i32, %c0_i32_0 : i32, i32
  }
  func.func @transform_7(%arg0: i32) -> (i32, i32) {
    %c0_i32 = arith.constant 0 : i32
    %c0_i32_0 = arith.constant 0 : i32
    %c0_i32_1 = arith.constant 0 : i32
    return %c0_i32, %c0_i32_0 : i32, i32
  }
  func.func @transform_8(%arg0: i32) -> (i32, i32) {
    %c0_i32 = arith.constant 0 : i32
    %c0_i32_0 = arith.constant 0 : i32
    %c0_i32_1 = arith.constant 0 : i32
    return %c0_i32, %c0_i32_0 : i32, i32
  }
  func.func @transform_9(%arg0: i32) -> (i32, i32) {
    %c0_i32 = arith.constant 0 : i32
    %c0_i32_0 = arith.constant 0 : i32
    return %arg0, %c0_i32 : i32, i32
  }
}

</mosaic_0001>

<llo_original>
// kernel: tpu_custom_call.1
$region0: #{tpu_custom_call.1}
  #allocation0 [shape = 'u32[]', space=smem, size = 0x4, offset = 0x4, fixed_abs, tag = 'smem constant byte address 0x4 - core index']
  #allocation1 [shape = 'u32[144,128]{1,0:T(1,128)}', space=vmem, size = 0x12000, scoped, tag = 'internal scratch']
  %s0 = inlined_call_operand.hbm [shape: f32[8,16], index: 0, kind: input, shape index: {}]
  %s1 = inlined_call_operand.vmem [shape: f32[16,32], index: 1, kind: input, shape index: {}]
  %s2 = inlined_call_operand.vmem [shape: f32[1,32], index: 2, kind: input, shape index: {}]
  %s3 = inlined_call_operand.vmem [shape: f32[32,32], index: 3, kind: input, shape index: {}]
  %s4 = inlined_call_operand.vmem [shape: f32[1,32], index: 4, kind: input, shape index: {}]
  %s5 = inlined_call_operand.hbm [shape: f32[32,32], index: 5, kind: input, shape index: {}]
  %s6 = inlined_call_operand.vmem [shape: f32[1,32], index: 6, kind: input, shape index: {}]
  %s7 = inlined_call_operand.vmem [shape: f32[32,8], index: 7, kind: input, shape index: {}]
  %s8 = inlined_call_operand.vmem [shape: f32[1,8], index: 8, kind: input, shape index: {}]
  %s9 = inlined_call_operand.hbm [shape: f32[8,8], index: 9, kind: output, shape index: {}]
  %s10 = sld [smem:[#allocation0]]
  $region54: #{tpu_custom_call.1} parent=0
    _
  %s12 = ssub.s32 1, %s10
  %s13 = scalar_select 0, %s12, %s10
  $region1: #{tpu_custom_call.1} parent=0
    #allocation2 [shape = 'u8[4096]{0}', space=vmem, size = 0x1000, scoped, tag = 'input window, operand 0, single buffered']
    #allocation3 [shape = 's32[1]{0}', space=sflag, size = 0x4, scoped, tag = 'scoped memory for tpu_custom_call.1']
    #allocation4 [shape = 's32[1]{0}', space=sflag, size = 0x4, scoped, tag = 'scoped memory for tpu_custom_call.1']
    #allocation5 [shape = 'u8[16384]{0}', space=vmem, size = 0x4000, scoped, tag = 'input window, operand 5, single buffered']
    #allocation6 [shape = 's32[1]{0}', space=sflag, size = 0x4, scoped, tag = 'scoped memory for tpu_custom_call.1']
    #allocation7 [shape = 'u8[4096]{0}', space=vmem, size = 0x1000, scoped, tag = 'output window, operand 0, single buffered']
    %14 = vsyncpa [#allocation3], 0
    %15 = vsyncpa [#allocation6], 0
    %16 = vsyncpa [#allocation4], 0
    // Predicated region
    $region2: #{tpu_custom_call.1} parent=1 // pred_check
      _
    $region3: #{tpu_custom_call.1} parent=1 // pred_check_branch
      %18 = sbr.rel (0) target = $region5
    $region4: #{tpu_custom_call.1} parent=1 // pred_region
      %s20 = ssub.s32 128, 128
      %21 = vsyncadd [#allocation3], %s20
      %s23 = sshll.u32 [#allocation2], 4
      %s24 = int_to_ptr.vmem [resolvable:$true] %s23
      %26 = dma.hbm_to_vmem [thread:$0]  %s0, 128, %s24, [#allocation3]
    $region5: #{tpu_custom_call.1} parent=1 // pred_fallthru
      _
    // Predicated region
    $region6: #{tpu_custom_call.1} parent=1 // pred_check
      _
    $region7: #{tpu_custom_call.1} parent=1 // pred_check_branch
      %28 = sbr.rel (0) target = $region9
    $region8: #{tpu_custom_call.1} parent=1 // pred_region
      _
    $region9: #{tpu_custom_call.1} parent=1 // pred_fallthru
      _
    // Predicated region
    $region10: #{tpu_custom_call.1} parent=1 // pred_check
      _
    $region11: #{tpu_custom_call.1} parent=1 // pred_check_branch
      %30 = sbr.rel (0) target = $region13
    $region12: #{tpu_custom_call.1} parent=1 // pred_region
      _
    $region13: #{tpu_custom_call.1} parent=1 // pred_fallthru
      _
    // Predicated region
    $region14: #{tpu_custom_call.1} parent=1 // pred_check
      _
    $region15: #{tpu_custom_call.1} parent=1 // pred_check_branch
      %32 = sbr.rel (0) target = $region17
    $region16: #{tpu_custom_call.1} parent=1 // pred_region
      _
    $region17: #{tpu_custom_call.1} parent=1 // pred_fallthru
      _
    // Predicated region
    $region18: #{tpu_custom_call.1} parent=1 // pred_check
      _
    $region19: #{tpu_custom_call.1} parent=1 // pred_check_branch
      %34 = sbr.rel (0) target = $region21
    $region20: #{tpu_custom_call.1} parent=1 // pred_region
      _
    $region21: #{tpu_custom_call.1} parent=1 // pred_fallthru
      _
    // Predicated region
    $region22: #{tpu_custom_call.1} parent=1 // pred_check
      _
    $region23: #{tpu_custom_call.1} parent=1 // pred_check_branch
      %36 = sbr.rel (0) target = $region25
    $region24: #{tpu_custom_call.1} parent=1 // pred_region
      %s38 = ssub.s32 512, 512
      %39 = vsyncadd [#allocation6], %s38
      %s40 = sshll.u32 [#allocation5], 4
      %s41 = int_to_ptr.vmem [resolvable:$true] %s40
      %46 = dma.hbm_to_vmem [thread:$0]  %s5, 512, %s41, [#allocation6], 128, 128, 8
    $region25: #{tpu_custom_call.1} parent=1 // pred_fallthru
      _
    // Predicated region
    $region26: #{tpu_custom_call.1} parent=1 // pred_check
      _
    $region27: #{tpu_custom_call.1} parent=1 // pred_check_branch
      %48 = sbr.rel (0) target = $region29
    $region28: #{tpu_custom_call.1} parent=1 // pred_region
      _
    $region29: #{tpu_custom_call.1} parent=1 // pred_fallthru
      _
    // Predicated region
    $region30: #{tpu_custom_call.1} parent=1 // pred_check
      _
    $region31: #{tpu_custom_call.1} parent=1 // pred_check_branch
      %50 = sbr.rel (0) target = $region33
    $region32: #{tpu_custom_call.1} parent=1 // pred_region
      _
    $region33: #{tpu_custom_call.1} parent=1 // pred_fallthru
      _
    // Predicated region
    $region34: #{tpu_custom_call.1} parent=1 // pred_check
      _
    $region35: #{tpu_custom_call.1} parent=1 // pred_check_branch
      %52 = sbr.rel (0) target = $region37
    $region36: #{tpu_custom_call.1} parent=1 // pred_region
      _
    $region37: #{tpu_custom_call.1} parent=1 // pred_fallthru
      _
    // Predicated region
    $region38: #{tpu_custom_call.1} parent=1 // pred_check
      _
    $region39: #{tpu_custom_call.1} parent=1 // pred_check_branch
      %54 = sbr.rel (0) target = $region41
    $region40: #{tpu_custom_call.1} parent=1 // pred_region
      %55 = dma.done [#allocation3], 128
    $region41: #{tpu_custom_call.1} parent=1 // pred_fallthru
      _
    // Predicated region
    $region42: #{tpu_custom_call.1} parent=1 // pred_check
      _
    $region43: #{tpu_custom_call.1} parent=1 // pred_check_branch
      %57 = sbr.rel (0) target = $region45
    $region44: #{tpu_custom_call.1} parent=1 // pred_region
      %58 = dma.done [#allocation6], 512
    $region45: #{tpu_custom_call.1} parent=1 // pred_fallthru
      _
    %v59 = vld [vmem:[#allocation2] sm:$0xff]
    %v60 = vld [vmem:[%s1] sm:$0xff]
    %v61 = vld [vmem:[%s1 + $0x8] sm:$0xff]
    %v62 = vld [vmem:[%s2] sm:$0x1]
    %v64 = vlaneseq
    %v65 = vshrl.u32 %v64, 7
    %v66 = vsub.s32 0, %v65
    %v67 = vrot.slane %v62, %v66
    %vm69 = vcmask 130048
    %v71 = vsel %vm69, %v59, 0
    %73 = vmatprep.subr.mxu0 0.0
    %74 = vmatpush1.msra.mxu0 %v60
    %75 = vmatprep.subr.mxu0 0.0
    %76 = vmatpush1.msra.mxu0 %v61
    %77 = vmatprep.subr.mxu0 0.0
    %78 = vmatpush1.msra.mxu0 0.0
    %79 = vmatprep.subr.mxu0 0.0
    %80 = vmatpush1.msra.mxu0 0.0
    %81 = vmatprep.subr.mxu0 0.0
    %82 = vmatpush1.msra.mxu0 0.0
    %83 = vmatprep.subr.mxu0 0.0
    %84 = vmatpush1.msra.mxu0 0.0
    %85 = vmatprep.subr.mxu0 0.0
    %86 = vmatpush1.msra.mxu0 0.0
    %87 = vmatprep.subr.mxu0 0.0
    %88 = vmatpush1.msra.mxu0 0.0
    %89 = vmatprep.subr.mxu0 0.0
    %90 = vmatpush1.msra.mxu0 0.0
    %91 = vmatprep.subr.mxu0 0.0
    %92 = vmatpush1.msra.mxu0 0.0
    %93 = vmatprep.subr.mxu0 0.0
    %94 = vmatpush1.msra.mxu0 0.0
    %95 = vmatprep.subr.mxu0 0.0
    %96 = vmatpush1.msra.mxu0 0.0
    %97 = vmatprep.subr.mxu0 0.0
    %98 = vmatpush1.msra.mxu0 0.0
    %99 = vmatprep.subr.mxu0 0.0
    %100 = vmatpush1.msra.mxu0 0.0
    %101 = vmatprep.subr.mxu0 0.0
    %102 = vmatpush1.msra.mxu0 0.0
    %103 = vmatprep.subr.mxu0 0.0
    %104 = vmatpush1.msra.mxu0 0.0
    %105 = vmatprep.subr.mxu0 0.0
    %106 = vmatpush1.msra.mxu0 0.0
    %107 = vmatprep.subr.mxu0 0.0
    %108 = vmatpush1.msra.mxu0 0.0
    %109 = vmatprep.subr.mxu0 0.0
    %110 = vmatpush1.msra.mxu0 0.0
    %111 = vmatprep.subr.mxu0 0.0
    %112 = vmatpush1.msra.mxu0 0.0
    %113 = vmatprep.subr.mxu0 0.0
    %114 = vmatpush1.msra.mxu0 0.0
    %115 = vmatprep.subr.mxu0 0.0
    %116 = vmatpush1.msra.mxu0 0.0
    %117 = vmatprep.subr.mxu0 0.0
    %118 = vmatpush1.msra.mxu0 0.0
    %119 = vmatprep.subr.mxu0 0.0
    %120 = vmatpush1.msra.mxu0 0.0
    %121 = vmatprep.subr.mxu0 0.0
    %122 = vmatpush1.msra.mxu0 0.0
    %123 = vmatprep.subr.mxu0 0.0
    %124 = vmatpush1.msra.mxu0 0.0
    %125 = vmatprep.subr.mxu0 0.0
    %126 = vmatpush1.msra.mxu0 0.0
    %127 = vmatprep.subr.mxu0 0.0
    %128 = vmatpush1.msra.mxu0 0.0
    %129 = vmatprep.subr.mxu0 0.0
    %130 = vmatpush1.msra.mxu0 0.0
    %131 = vmatprep.subr.mxu0 0.0
    %132 = vmatpush1.msra.mxu0 0.0
    %133 = vmatprep.subr.mxu0 0.0
    %134 = vmatpush1.msra.mxu0 0.0
    %135 = vmatprep.subr.mxu0 0.0
    %136 = vmatpush1.msra.mxu0 0.0
    %137 = vmatprep.mubr.f32.mxu0 0.0
    %138 = vmatmul.mubr.f32.gmra.mrb[0].mxu0 %v71
    %v139 = vpop.f32.mrb[0].mxu0
    %v140 = vadd.f32 %v67, %v139
    %v141 = vpop.f32.mrb[0].mxu0
    %142 = vdwg.mxu0
    %v143 = vmax.f32 %v140, 0.0
    %v144 = vld [vmem:[%s3] sm:$0xff]
    %v145 = vld [vmem:[%s3 + $0x8] sm:$0xff]
    %v146 = vld [vmem:[%s3 + $0x10] sm:$0xff]
    %v147 = vld [vmem:[%s3 + $0x18] sm:$0xff]
    %v148 = vld [vmem:[%s4] sm:$0x1]
    %v150 = vlaneseq
    %v151 = vshrl.u32 %v150, 7
    %v152 = vsub.s32 0, %v151
    %v153 = vrot.slane %v148, %v152
    %vm155 = vcmask 261120
    %v157 = vsel %vm155, %v143, 0
    %159 = vmatprep.subr.mxu0 0.0
    %160 = vmatpush1.msra.mxu0 %v144
    %161 = vmatprep.subr.mxu0 0.0
    %162 = vmatpush1.msra.mxu0 %v145
    %163 = vmatprep.subr.mxu0 0.0
    %164 = vmatpush1.msra.mxu0 %v146
    %165 = vmatprep.subr.mxu0 0.0
    %166 = vmatpush1.msra.mxu0 %v147
    %167 = vmatprep.subr.mxu0 0.0
    %168 = vmatpush1.msra.mxu0 0.0
    %169 = vmatprep.subr.mxu0 0.0
    %170 = vmatpush1.msra.mxu0 0.0
    %171 = vmatprep.subr.mxu0 0.0
    %172 = vmatpush1.msra.mxu0 0.0
    %173 = vmatprep.subr.mxu0 0.0
    %174 = vmatpush1.msra.mxu0 0.0
    %175 = vmatprep.subr.mxu0 0.0
    %176 = vmatpush1.msra.mxu0 0.0
    %177 = vmatprep.subr.mxu0 0.0
    %178 = vmatpush1.msra.mxu0 0.0
    %179 = vmatprep.subr.mxu0 0.0
    %180 = vmatpush1.msra.mxu0 0.0
    %181 = vmatprep.subr.mxu0 0.0
    %182 = vmatpush1.msra.mxu0 0.0
    %183 = vmatprep.subr.mxu0 0.0
    %184 = vmatpush1.msra.mxu0 0.0
    %185 = vmatprep.subr.mxu0 0.0
    %186 = vmatpush1.msra.mxu0 0.0
    %187 = vmatprep.subr.mxu0 0.0
    %188 = vmatpush1.msra.mxu0 0.0
    %189 = vmatprep.subr.mxu0 0.0
    %190 = vmatpush1.msra.mxu0 0.0
    %191 = vmatprep.subr.mxu0 0.0
    %192 = vmatpush1.msra.mxu0 0.0
    %193 = vmatprep.subr.mxu0 0.0
    %194 = vmatpush1.msra.mxu0 0.0
    %195 = vmatprep.subr.mxu0 0.0
    %196 = vmatpush1.msra.mxu0 0.0
    %197 = vmatprep.subr.mxu0 0.0
    %198 = vmatpush1.msra.mxu0 0.0
    %199 = vmatprep.subr.mxu0 0.0
    %200 = vmatpush1.msra.mxu0 0.0
    %201 = vmatprep.subr.mxu0 0.0
    %202 = vmatpush1.msra.mxu0 0.0
    %203 = vmatprep.subr.mxu0 0.0
    %204 = vmatpush1.msra.mxu0 0.0
    %205 = vmatprep.subr.mxu0 0.0
    %206 = vmatpush1.msra.mxu0 0.0
    %207 = vmatprep.subr.mxu0 0.0
    %208 = vmatpush1.msra.mxu0 0.0
    %209 = vmatprep.subr.mxu0 0.0
    %210 = vmatpush1.msra.mxu0 0.0
    %211 = vmatprep.subr.mxu0 0.0
    %212 = vmatpush1.msra.mxu0 0.0
    %213 = vmatprep.subr.mxu0 0.0
    %214 = vmatpush1.msra.mxu0 0.0
    %215 = vmatprep.subr.mxu0 0.0
    %216 = vmatpush1.msra.mxu0 0.0
    %217 = vmatprep.subr.mxu0 0.0
    %218 = vmatpush1.msra.mxu0 0.0
    %219 = vmatprep.subr.mxu0 0.0
    %220 = vmatpush1.msra.mxu0 0.0
    %221 = vmatprep.subr.mxu0 0.0
    %222 = vmatpush1.msra.mxu0 0.0
    %223 = vmatprep.mubr.f32.mxu0 0.0
    %224 = vmatmul.mubr.f32.gmra.mrb[0].mxu0 %v157
    %v225 = vpop.f32.mrb[0].mxu0
    %v226 = vadd.f32 %v153, %v225
    %v227 = vpop.f32.mrb[0].mxu0
    %228 = vdwg.mxu0
    %v229 = vmax.f32 %v226, 0.0
    %v230 = vld [vmem:[#allocation5] sm:$0xff]
    %v231 = vld [vmem:[#allocation5 + $0x8] sm:$0xff]
    %v232 = vld [vmem:[#allocation5 + $0x10] sm:$0xff]
    %v233 = vld [vmem:[#allocation5 + $0x18] sm:$0xff]
    %v234 = vld [vmem:[%s6] sm:$0x1]
    %v236 = vlaneseq
    %v237 = vshrl.u32 %v236, 7
    %v238 = vsub.s32 0, %v237
    %v239 = vrot.slane %v234, %v238
    %v242 = vsel %vm155, %v229, 0
    %244 = vmatprep.subr.mxu0 0.0
    %245 = vmatpush1.msra.mxu0 %v230
    %246 = vmatprep.subr.mxu0 0.0
    %247 = vmatpush1.msra.mxu0 %v231
    %248 = vmatprep.subr.mxu0 0.0
    %249 = vmatpush1.msra.mxu0 %v232
    %250 = vmatprep.subr.mxu0 0.0
    %251 = vmatpush1.msra.mxu0 %v233
    %252 = vmatprep.subr.mxu0 0.0
    %253 = vmatpush1.msra.mxu0 0.0
    %254 = vmatprep.subr.mxu0 0.0
    %255 = vmatpush1.msra.mxu0 0.0
    %256 = vmatprep.subr.mxu0 0.0
    %257 = vmatpush1.msra.mxu0 0.0
    %258 = vmatprep.subr.mxu0 0.0
    %259 = vmatpush1.msra.mxu0 0.0
    %260 = vmatprep.subr.mxu0 0.0
    %261 = vmatpush1.msra.mxu0 0.0
    %262 = vmatprep.subr.mxu0 0.0
    %263 = vmatpush1.msra.mxu0 0.0
    %264 = vmatprep.subr.mxu0 0.0
    %265 = vmatpush1.msra.mxu0 0.0
    %266 = vmatprep.subr.mxu0 0.0
    %267 = vmatpush1.msra.mxu0 0.0
    %268 = vmatprep.subr.mxu0 0.0
    %269 = vmatpush1.msra.mxu0 0.0
    %270 = vmatprep.subr.mxu0 0.0
    %271 = vmatpush1.msra.mxu0 0.0
    %272 = vmatprep.subr.mxu0 0.0
    %273 = vmatpush1.msra.mxu0 0.0
    %274 = vmatprep.subr.mxu0 0.0
    %275 = vmatpush1.msra.mxu0 0.0
    %276 = vmatprep.subr.mxu0 0.0
    %277 = vmatpush1.msra.mxu0 0.0
    %278 = vmatprep.subr.mxu0 0.0
    %279 = vmatpush1.msra.mxu0 0.0
    %280 = vmatprep.subr.mxu0 0.0
    %281 = vmatpush1.msra.mxu0 0.0
    %282 = vmatprep.subr.mxu0 0.0
    %283 = vmatpush1.msra.mxu0 0.0
    %284 = vmatprep.subr.mxu0 0.0
    %285 = vmatpush1.msra.mxu0 0.0
    %286 = vmatprep.subr.mxu0 0.0
    %287 = vmatpush1.msra.mxu0 0.0
    %288 = vmatprep.subr.mxu0 0.0
    %289 = vmatpush1.msra.mxu0 0.0
    %290 = vmatprep.subr.mxu0 0.0
    %291 = vmatpush1.msra.mxu0 0.0
    %292 = vmatprep.subr.mxu0 0.0
    %293 = vmatpush1.msra.mxu0 0.0
    %294 = vmatprep.subr.mxu0 0.0
    %295 = vmatpush1.msra.mxu0 0.0
    %296 = vmatprep.subr.mxu0 0.0
    %297 = vmatpush1.msra.mxu0 0.0
    %298 = vmatprep.subr.mxu0 0.0
    %299 = vmatpush1.msra.mxu0 0.0
    %300 = vmatprep.subr.mxu0 0.0
    %301 = vmatpush1.msra.mxu0 0.0
    %302 = vmatprep.subr.mxu0 0.0
    %303 = vmatpush1.msra.mxu0 0.0
    %304 = vmatprep.subr.mxu0 0.0
    %305 = vmatpush1.msra.mxu0 0.0
    %306 = vmatprep.subr.mxu0 0.0
    %307 = vmatpush1.msra.mxu0 0.0
    %308 = vmatprep.mubr.f32.mxu0 0.0
    %309 = vmatmul.mubr.f32.gmra.mrb[0].mxu0 %v242
    %v310 = vpop.f32.mrb[0].mxu0
    %v311 = vadd.f32 %v239, %v310
    %v312 = vpop.f32.mrb[0].mxu0
    %313 = vdwg.mxu0
    %v314 = vmax.f32 %v311, 0.0
    %v315 = vld [vmem:[%s7] sm:$0xff]
    %v316 = vld [vmem:[%s7 + $0x8] sm:$0xff]
    %v317 = vld [vmem:[%s7 + $0x10] sm:$0xff]
    %v318 = vld [vmem:[%s7 + $0x18] sm:$0xff]
    %v319 = vld [vmem:[%s8] sm:$0x1]
    %v321 = vlaneseq
    %v322 = vshrl.u32 %v321, 7
    %v323 = vsub.s32 0, %v322
    %v324 = vrot.slane %v319, %v323
    %v327 = vsel %vm155, %v314, 0
    %329 = vmatprep.subr.mxu0 0.0
    %330 = vmatpush1.msra.mxu0 %v315
    %331 = vmatprep.subr.mxu0 0.0
    %332 = vmatpush1.msra.mxu0 %v316
    %333 = vmatprep.subr.mxu0 0.0
    %334 = vmatpush1.msra.mxu0 %v317
    %335 = vmatprep.subr.mxu0 0.0
    %336 = vmatpush1.msra.mxu0 %v318
    %337 = vmatprep.subr.mxu0 0.0
    %338 = vmatpush1.msra.mxu0 0.0
    %339 = vmatprep.subr.mxu0 0.0
    %340 = vmatpush1.msra.mxu0 0.0
    %341 = vmatprep.subr.mxu0 0.0
    %342 = vmatpush1.msra.mxu0 0.0
    %343 = vmatprep.subr.mxu0 0.0
    %344 = vmatpush1.msra.mxu0 0.0
    %345 = vmatprep.subr.mxu0 0.0
    %346 = vmatpush1.msra.mxu0 0.0
    %347 = vmatprep.subr.mxu0 0.0
    %348 = vmatpush1.msra.mxu0 0.0
    %349 = vmatprep.subr.mxu0 0.0
    %350 = vmatpush1.msra.mxu0 0.0
    %351 = vmatprep.subr.mxu0 0.0
    %352 = vmatpush1.msra.mxu0 0.0
    %353 = vmatprep.subr.mxu0 0.0
    %354 = vmatpush1.msra.mxu0 0.0
    %355 = vmatprep.subr.mxu0 0.0
    %356 = vmatpush1.msra.mxu0 0.0
    %357 = vmatprep.subr.mxu0 0.0
    %358 = vmatpush1.msra.mxu0 0.0
    %359 = vmatprep.subr.mxu0 0.0
    %360 = vmatpush1.msra.mxu0 0.0
    %361 = vmatprep.subr.mxu0 0.0
    %362 = vmatpush1.msra.mxu0 0.0
    %363 = vmatprep.subr.mxu0 0.0
    %364 = vmatpush1.msra.mxu0 0.0
    %365 = vmatprep.subr.mxu0 0.0
    %366 = vmatpush1.msra.mxu0 0.0
    %367 = vmatprep.subr.mxu0 0.0
    %368 = vmatpush1.msra.mxu0 0.0
    %369 = vmatprep.subr.mxu0 0.0
    %370 = vmatpush1.msra.mxu0 0.0
    %371 = vmatprep.subr.mxu0 0.0
    %372 = vmatpush1.msra.mxu0 0.0
    %373 = vmatprep.subr.mxu0 0.0
    %374 = vmatpush1.msra.mxu0 0.0
    %375 = vmatprep.subr.mxu0 0.0
    %376 = vmatpush1.msra.mxu0 0.0
    %377 = vmatprep.subr.mxu0 0.0
    %378 = vmatpush1.msra.mxu0 0.0
    %379 = vmatprep.subr.mxu0 0.0
    %380 = vmatpush1.msra.mxu0 0.0
    %381 = vmatprep.subr.mxu0 0.0
    %382 = vmatpush1.msra.mxu0 0.0
    %383 = vmatprep.subr.mxu0 0.0
    %384 = vmatpush1.msra.mxu0 0.0
    %385 = vmatprep.subr.mxu0 0.0
    %386 = vmatpush1.msra.mxu0 0.0
    %387 = vmatprep.subr.mxu0 0.0
    %388 = vmatpush1.msra.mxu0 0.0
    %389 = vmatprep.subr.mxu0 0.0
    %390 = vmatpush1.msra.mxu0 0.0
    %391 = vmatprep.subr.mxu0 0.0
    %392 = vmatpush1.msra.mxu0 0.0
    %393 = vmatprep.mubr.f32.mxu0 0.0
    %394 = vmatmul.mubr.f32.gmra.mrb[0].mxu0 %v327
    %v395 = vpop.f32.mrb[0].mxu0
    %v396 = vadd.f32 %v324, %v395
    %v397 = vpop.f32.mrb[0].mxu0
    %398 = vdwg.mxu0
    %vm399 = vcmask 64512
    %v400 = vsel %vm399, %v396, -inf
    %401 = vmax.xlane.f32.xlu0 %v400
    %v402 = vpop.xlane.xlu0 %401
    %v403 = vsub.f32 %v396, %v402
    %v404 = vmul.f32 %v403, 1.442695
    %v405 = vpow.pop %v404
    %v406 = vsel %vm399, %v405, 0.0
    %407 = vadd.xlane.f32.xlu0 %v406
    %v408 = vpop.xlane.xlu0 %407
    %v409 = vrcp.pop %v408
    %v410 = vmul.f32 %v405, %v409
    %411 = vst.msk [vmem:[#allocation7] sm:$0xff] %vm399, %v410
    // Predicated region
    $region46: #{tpu_custom_call.1} parent=1 // pred_check
      _
    $region47: #{tpu_custom_call.1} parent=1 // pred_check_branch
      %413 = sbr.rel (0) target = $region49
    $region48: #{tpu_custom_call.1} parent=1 // pred_region
      %s415 = ssub.s32 128, 128
      %416 = vsyncadd [#allocation4], %s415
      %s418 = sshll.u32 [#allocation7], 4
      %s419 = int_to_ptr.vmem [resolvable:$true] %s418
      %421 = dma.vmem_to_hbm [thread:$0]  %s419, 128, %s9, [#allocation4]
    $region49: #{tpu_custom_call.1} parent=1 // pred_fallthru
      _
    // Predicated region
    $region50: #{tpu_custom_call.1} parent=1 // pred_check
      _
    $region51: #{tpu_custom_call.1} parent=1 // pred_check_branch
      %423 = sbr.rel (0) target = $region53
    $region52: #{tpu_custom_call.1} parent=1 // pred_region
      %424 = dma.done [#allocation4], 128
    $region53: #{tpu_custom_call.1} parent=1 // pred_fallthru
      _
    %425 = vsyncpa [#allocation3], 1
    %426 = vsyncpa [#allocation6], 1
    %427 = vsyncpa [#allocation4], 1

</llo_original>
